<compile_context>
chip_gen: v5e
topology: v5e:2x2
jax: 0.10.0
libtpu: 0.0.40
codegen_flags: <defaults>
</compile_context>

<pallas_src>
import jax
import jax.numpy as jnp
from jax import lax
from jax.experimental import pallas as pl
from jax.experimental.pallas import tpu as pltpu


def attention_kernel(x_ref, g_ref, wxt_ref, wgt_ref, b_ref, o_ref):
    # x_ref, g_ref : (Bt, T, D)  f32 activations
    # wxt_ref      : (D, T)      bf16, W_x pre-transposed (canonical MXU form)
    # wgt_ref      : (D, T)      bf16, W_g pre-transposed
    # b_ref        : (1, T)      f32, fused bias  b_x + b_g
    # o_ref        : (Bt, T, D)
    Bt, T, D = x_ref.shape
    n = Bt * T

    x_f32 = x_ref[...]                                   # (Bt, T, D) f32
    # Flatten (batch, time) rows; f32 rows merge tile-aligned, then cast to
    # bf16 only for the MXU operands.
    x2 = x_f32.reshape(n, D).astype(jnp.bfloat16)        # (n, D) bf16
    g2 = g_ref[...].reshape(n, D).astype(jnp.bfloat16)   # (n, D) bf16

    # Projections: scores[r, s] = x[r]·Wx[s] + g[r]·Wg[s] + (bx+bg)[s]
    # Canonical (n, D) @ (D, T) matmuls, f32 accumulation.
    scores = (
        jnp.dot(x2, wxt_ref[...], preferred_element_type=jnp.float32)
        + jnp.dot(g2, wgt_ref[...], preferred_element_type=jnp.float32)
        + b_ref[...]
    )                                                    # (n, T) f32

    # Numerically-stable softmax over the last axis, fully in f32 (exact).
    m = jnp.max(scores, axis=-1, keepdims=True)
    e = jnp.exp(scores - m)
    attn = e / jnp.sum(e, axis=-1, keepdims=True)        # (n, T) f32

    # out[b, s, d] = sum_t attn[b, t, s] * x[b, t, d]
    # Explicit (tiny) transpose on the otherwise-idle XLU, then one batched
    # dot_general in the canonical 'bst,btd->bsd' form.
    attn_t = jnp.swapaxes(attn.reshape(Bt, T, T), 1, 2)  # (Bt, T_s, T_t) f32
    x3 = x2.reshape(Bt, T, D)                            # (Bt, T_t, D) bf16
    out = lax.dot_general(
        attn_t.astype(jnp.bfloat16), x3,
        dimension_numbers=(((2,), (1,)), ((0,), (0,))),
        preferred_element_type=jnp.float32,
    )                                                    # (Bt, T_s, D) f32
    o_ref[...] = out.astype(o_ref.dtype)


def prepare_attention_params(wx, bx, wg, bg):
    """One-time parameter prep (hoisted out of the per-forward path).

    nn.Linear stores weights as (out=T, in=D); pre-transpose to (D, T) so the
    in-kernel matmul is the canonical MXU form, cast to bf16 (native MXU
    dtype), and pre-add the two biases.
    """
    wxt = jnp.asarray(wx).T.astype(jnp.bfloat16)                     # (D, T)
    wgt = jnp.asarray(wg).T.astype(jnp.bfloat16)                     # (D, T)
    bias = (jnp.asarray(bx) + jnp.asarray(bg)).astype(jnp.float32)
    bias = bias.reshape(1, -1)                                       # (1, T)
    return wxt, wgt, bias


def attention_pallas(x, g, params, *, block_b=None):
    """Per-call path: nothing but the pallas_call (no per-call XLA ops)."""
    wxt, wgt, bias = params
    B, T, D = x.shape
    if block_b is None:
        # Single grid step: the whole (tiny) problem lives in VMEM.  Only split
        # (e.g. block_b = B//2 for v7x's two TensorCores) once per-core work
        # clearly exceeds the ~0.35 us per-grid-step overhead.
        block_b = B
    assert B % block_b == 0

    return pl.pallas_call(
        attention_kernel,
        out_shape=jax.ShapeDtypeStruct((B, T, D), x.dtype),
        grid_spec=pltpu.PrefetchScalarGridSpec(
            num_scalar_prefetch=0,
            grid=(B // block_b,),
            in_specs=[
                pl.BlockSpec((block_b, T, D), lambda i: (i, 0, 0)),   # x
                pl.BlockSpec((block_b, T, D), lambda i: (i, 0, 0)),   # g
                pl.BlockSpec((D, T), lambda i: (0, 0)),               # W_x^T
                pl.BlockSpec((D, T), lambda i: (0, 0)),               # W_g^T
                pl.BlockSpec((1, T), lambda i: (0, 0)),               # bias
            ],
            out_specs=pl.BlockSpec((block_b, T, D), lambda i: (i, 0, 0)),
        ),
        compiler_params=pltpu.CompilerParams(
            dimension_semantics=("parallel",),
        ),
    )(x, g, wxt, wgt, bias)


def attention_ref(x, g, wx, bx, wg, bg):
    # Pure-JAX (f32) reference of the PyTorch forward, for verification.
    x_proj = jnp.einsum("btd,sd->bts", x, wx) + bx
    g_proj = jnp.einsum("btd,sd->bts", g, wg) + bg
    a = jax.nn.softmax(x_proj + g_proj, axis=-1)
    return jnp.einsum("bts,btd->bsd", a, x)


if __name__ == "__main__":
    B, T, D = 2, 8, 32   # batch, time_steps, input_dim

    key = jax.random.PRNGKey(0)
    kx, kg, kwx, kbx, kwg, kbg = jax.random.split(key, 6)

    x = jax.random.normal(kx, (B, T, D), dtype=jnp.float32)
    g = jax.random.normal(kg, (B, T, D), dtype=jnp.float32)

    # Deterministic nn.Linear-style init: U(-1/sqrt(D), 1/sqrt(D)).
    bound = 1.0 / (D ** 0.5)
    wx = jax.random.uniform(kwx, (T, D), jnp.float32, -bound, bound)
    bx = jax.random.uniform(kbx, (T,), jnp.float32, -bound, bound)
    wg = jax.random.uniform(kwg, (T, D), jnp.float32, -bound, bound)
    bg = jax.random.uniform(kbg, (T,), jnp.float32, -bound, bound)

    # One-time parameter prep (outside the per-forward path).
    params = prepare_attention_params(wx, bx, wg, bg)

    out = attention_pallas(x, g, params)
    out = jax.block_until_ready(out)

    ref = attention_ref(x, g, wx, bx, wg, bg)
    assert out.shape == (B, T, D)
    # bf16 MXU operands (f32 accumulation) vs the pure-f32 reference: allow a
    # bf16-level tolerance.  The softmax itself is exact f32.
    assert jnp.allclose(out, ref, atol=5e-2, rtol=5e-2), "mismatch vs reference"

    print("KERNEL_OK")
</pallas_src>

<mosaic_0001>
module attributes {stable_mosaic.version = 11 : i64} {
  func.func @attention_kernel(%arg0: i32, %arg1: memref<2x8x32xf32, #tpu.memory_space<vmem>>, %arg2: memref<2x8x32xf32, #tpu.memory_space<vmem>>, %arg3: memref<32x8xbf16, #tpu.memory_space<vmem>>, %arg4: memref<32x8xbf16, #tpu.memory_space<vmem>>, %arg5: memref<1x8xf32, #tpu.memory_space<vmem>>, %arg6: memref<2x8x32xf32, #tpu.memory_space<vmem>>) attributes {dimension_semantics = [#tpu.dimension_semantics<parallel>], iteration_bounds = array<i64: 1>, scalar_prefetch = 0 : i64, scratch_operands = 0 : i64, tpu.core_type = #tpu.core_type<tc>, window_params = [{transform_indices = @transform_0, window_bounds = array<i64: 2, 8, 32>}, {transform_indices = @transform_1, window_bounds = array<i64: 2, 8, 32>}, {pipeline_mode = #tpu.pipeline_mode<synchronous>, transform_indices = @transform_2, window_bounds = array<i64: 32, 8>}, {pipeline_mode = #tpu.pipeline_mode<synchronous>, transform_indices = @transform_3, window_bounds = array<i64: 32, 8>}, {pipeline_mode = #tpu.pipeline_mode<synchronous>, transform_indices = @transform_4, window_bounds = array<i64: 1, 8>}, {transform_indices = @transform_5, window_bounds = array<i64: 2, 8, 32>}]} {
    %c0 = arith.constant 0 : index
    %c0_0 = arith.constant 0 : index
    %c0_1 = arith.constant 0 : index
    %0 = vector.load %arg1[%c0, %c0_0, %c0_1] : memref<2x8x32xf32, #tpu.memory_space<vmem>>, vector<2x8x32xf32>
    %1 = vector.shape_cast %0 : vector<2x8x32xf32> to vector<16x32xf32>
    %2 = arith.truncf %1 : vector<16x32xf32> to vector<16x32xbf16>
    %c0_2 = arith.constant 0 : index
    %c0_3 = arith.constant 0 : index
    %c0_4 = arith.constant 0 : index
    %3 = vector.load %arg2[%c0_2, %c0_3, %c0_4] : memref<2x8x32xf32, #tpu.memory_space<vmem>>, vector<2x8x32xf32>
    %4 = vector.shape_cast %3 : vector<2x8x32xf32> to vector<16x32xf32>
    %5 = arith.truncf %4 : vector<16x32xf32> to vector<16x32xbf16>
    %c0_5 = arith.constant 0 : index
    %c0_6 = arith.constant 0 : index
    %6 = vector.load %arg3[%c0_5, %c0_6] : memref<32x8xbf16, #tpu.memory_space<vmem>>, vector<32x8xbf16>
    %cst = arith.constant dense<0.000000e+00> : vector<16x8xf32>
    %7 = tpu.matmul %2, %6, %cst {dimension_numbers = #tpu.dot_dimension_numbers<[1], [0], [0], [1], [0, 0, 1, 1], [], []>} : vector<16x32xbf16>, vector<32x8xbf16>, vector<16x8xf32> -> vector<16x8xf32>
    %c0_7 = arith.constant 0 : index
    %c0_8 = arith.constant 0 : index
    %8 = vector.load %arg4[%c0_7, %c0_8] : memref<32x8xbf16, #tpu.memory_space<vmem>>, vector<32x8xbf16>
    %cst_9 = arith.constant dense<0.000000e+00> : vector<16x8xf32>
    %9 = tpu.matmul %5, %8, %cst_9 {dimension_numbers = #tpu.dot_dimension_numbers<[1], [0], [0], [1], [0, 0, 1, 1], [], []>} : vector<16x32xbf16>, vector<32x8xbf16>, vector<16x8xf32> -> vector<16x8xf32>
    %10 = arith.addf %7, %9 : vector<16x8xf32>
    %c0_10 = arith.constant 0 : index
    %c0_11 = arith.constant 0 : index
    %11 = vector.load %arg5[%c0_10, %c0_11] : memref<1x8xf32, #tpu.memory_space<vmem>>, vector<1x8xf32>
    %12 = vector.broadcast %11 : vector<1x8xf32> to vector<16x8xf32>
    %13 = arith.addf %10, %12 : vector<16x8xf32>
    %cst_12 = arith.constant dense<0xFF800000> : vector<16xf32>
    %14 = vector.multi_reduction <maximumf>, %13, %cst_12 [1] : vector<16x8xf32> to vector<16xf32>
    %15 = vector.shape_cast %14 : vector<16xf32> to vector<16x1xf32>
    %16 = vector.broadcast %15 : vector<16x1xf32> to vector<16x8xf32>
    %17 = arith.subf %13, %16 : vector<16x8xf32>
    %18 = math.exp %17 : vector<16x8xf32>
    %cst_13 = arith.constant dense<0.000000e+00> : vector<16xf32>
    %19 = vector.multi_reduction <add>, %18, %cst_13 [1] : vector<16x8xf32> to vector<16xf32>
    %20 = vector.shape_cast %19 : vector<16xf32> to vector<16x1xf32>
    %21 = vector.broadcast %20 : vector<16x1xf32> to vector<16x8xf32>
    %22 = arith.divf %18, %21 : vector<16x8xf32>
    %23 = vector.shape_cast %22 : vector<16x8xf32> to vector<2x8x8xf32>
    %24 = tpu.transpose %23, [0, 2, 1] : vector<2x8x8xf32> -> vector<2x8x8xf32>
    %25 = vector.shape_cast %2 : vector<16x32xbf16> to vector<2x8x32xbf16>
    %26 = arith.truncf %24 : vector<2x8x8xf32> to vector<2x8x8xbf16>
    %cst_14 = arith.constant dense<0.000000e+00> : vector<2x8x32xf32>
    %27 = tpu.matmul %26, %25, %cst_14 {dimension_numbers = #tpu.dot_dimension_numbers<[2], [1], [1], [2], [0, 0, 0, 1, 1, 2], [0], [0]>} : vector<2x8x8xbf16>, vector<2x8x32xbf16>, vector<2x8x32xf32> -> vector<2x8x32xf32>
    %c0_15 = arith.constant 0 : index
    %c0_16 = arith.constant 0 : index
    %c0_17 = arith.constant 0 : index
    %28 = vector.load %arg6[%c0_15, %c0_16, %c0_17] : memref<2x8x32xf32, #tpu.memory_space<vmem>>, vector<2x8x32xf32>
    tpu.vector_store %arg6[%c0_15, %c0_16, %c0_17], %27 {strides = array<i32>} : memref<2x8x32xf32, #tpu.memory_space<vmem>>, vector<2x8x32xf32>,
    return
  }
  func.func @transform_0(%arg0: i32) -> (i32, i32, i32) {
    %c0_i32 = arith.constant 0 : i32
    %c0_i32_0 = arith.constant 0 : i32
    %c0_i32_1 = arith.constant 0 : i32
    return %arg0, %c0_i32, %c0_i32_0 : i32, i32, i32
  }
  func.func @transform_1(%arg0: i32) -> (i32, i32, i32) {
    %c0_i32 = arith.constant 0 : i32
    %c0_i32_0 = arith.constant 0 : i32
    %c0_i32_1 = arith.constant 0 : i32
    return %arg0, %c0_i32, %c0_i32_0 : i32, i32, i32
  }
  func.func @transform_2(%arg0: i32) -> (i32, i32) {
    %c0_i32 = arith.constant 0 : i32
    %c0_i32_0 = arith.constant 0 : i32
    %c0_i32_1 = arith.constant 0 : i32
    return %c0_i32, %c0_i32_0 : i32, i32
  }
  func.func @transform_3(%arg0: i32) -> (i32, i32) {
    %c0_i32 = arith.constant 0 : i32
    %c0_i32_0 = arith.constant 0 : i32
    %c0_i32_1 = arith.constant 0 : i32
    return %c0_i32, %c0_i32_0 : i32, i32
  }
  func.func @transform_4(%arg0: i32) -> (i32, i32) {
    %c0_i32 = arith.constant 0 : i32
    %c0_i32_0 = arith.constant 0 : i32
    %c0_i32_1 = arith.constant 0 : i32
    return %c0_i32, %c0_i32_0 : i32, i32
  }
  func.func @transform_5(%arg0: i32) -> (i32, i32, i32) {
    %c0_i32 = arith.constant 0 : i32
    %c0_i32_0 = arith.constant 0 : i32
    %c0_i32_1 = arith.constant 0 : i32
    return %arg0, %c0_i32, %c0_i32_0 : i32, i32, i32
  }
}

</mosaic_0001>

<llo_original>
// kernel: tpu_custom_call.1
$region0: #{tpu_custom_call.1}
  #allocation0 [shape = 'u32[]', space=smem, size = 0x4, offset = 0x4, fixed_abs, tag = 'smem constant byte address 0x4 - core index']
  #allocation1 [shape = 'u32[72,128]{1,0:T(1,128)}', space=vmem, size = 0x9000, scoped, tag = 'internal scratch']
  %s0 = inlined_call_operand.vmem [shape: f32[2,8,32], index: 0, kind: input, shape index: {}]
  %s1 = inlined_call_operand.vmem [shape: f32[2,8,32], index: 1, kind: input, shape index: {}]
  %s2 = inlined_call_operand.vmem [shape: bf16[32,8], index: 2, kind: input, shape index: {}]
  %s3 = inlined_call_operand.vmem [shape: bf16[32,8], index: 3, kind: input, shape index: {}]
  %s4 = inlined_call_operand.vmem [shape: f32[1,8], index: 4, kind: input, shape index: {}]
  %s5 = inlined_call_operand.hbm [shape: f32[2,8,32], index: 5, kind: output, shape index: {}]
  %s6 = sld [smem:[#allocation0]]
  $region30: #{tpu_custom_call.1} parent=0
    _
  %s8 = ssub.s32 1, %s6
  %s9 = scalar_select 0, %s8, %s6
  $region1: #{tpu_custom_call.1} parent=0
    #allocation2 [shape = 'u8[8192]{0}', space=vmem, size = 0x2000, scoped, tag = 'output window, operand 0, single buffered']
    #allocation3 [shape = 's32[1]{0}', space=sflag, size = 0x4, scoped, tag = 'scoped memory for tpu_custom_call.1']
    %10 = vsyncpa [#allocation3], 0
    // Predicated region
    $region2: #{tpu_custom_call.1} parent=1 // pred_check
      _
    $region3: #{tpu_custom_call.1} parent=1 // pred_check_branch
      %12 = sbr.rel (0) target = $region5
    $region4: #{tpu_custom_call.1} parent=1 // pred_region
      _
    $region5: #{tpu_custom_call.1} parent=1 // pred_fallthru
      _
    // Predicated region
    $region6: #{tpu_custom_call.1} parent=1 // pred_check
      _
    $region7: #{tpu_custom_call.1} parent=1 // pred_check_branch
      %14 = sbr.rel (0) target = $region9
    $region8: #{tpu_custom_call.1} parent=1 // pred_region
      _
    $region9: #{tpu_custom_call.1} parent=1 // pred_fallthru
      _
    // Predicated region
    $region10: #{tpu_custom_call.1} parent=1 // pred_check
      _
    $region11: #{tpu_custom_call.1} parent=1 // pred_check_branch
      %16 = sbr.rel (0) target = $region13
    $region12: #{tpu_custom_call.1} parent=1 // pred_region
      _
    $region13: #{tpu_custom_call.1} parent=1 // pred_fallthru
      _
    // Predicated region
    $region14: #{tpu_custom_call.1} parent=1 // pred_check
      _
    $region15: #{tpu_custom_call.1} parent=1 // pred_check_branch
      %18 = sbr.rel (0) target = $region17
    $region16: #{tpu_custom_call.1} parent=1 // pred_region
      _
    $region17: #{tpu_custom_call.1} parent=1 // pred_fallthru
      _
    // Predicated region
    $region18: #{tpu_custom_call.1} parent=1 // pred_check
      _
    $region19: #{tpu_custom_call.1} parent=1 // pred_check_branch
      %20 = sbr.rel (0) target = $region21
    $region20: #{tpu_custom_call.1} parent=1 // pred_region
      _
    $region21: #{tpu_custom_call.1} parent=1 // pred_fallthru
      _
    %v22 = vld [vmem:[%s0] sm:$0xff]
    %v23 = vld [vmem:[%s0 + $0x8] sm:$0xff]
    %v24 = vpack.c.bf16 %v22, %v22
    %v25 = vpack.c.bf16 %v23, %v23
    %v26 = vld [vmem:[%s1] sm:$0xff]
    %v27 = vld [vmem:[%s1 + $0x8] sm:$0xff]
    %v28 = vpack.c.bf16 %v27, %v26
    %v29 = vld [vmem:[%s2] sm:$0xf]
    %v30 = vld [vmem:[%s2 + $0x4] sm:$0xf]
    %v31 = vld [vmem:[%s2 + $0x8] sm:$0xf]
    %v32 = vld [vmem:[%s2 + $0xc] sm:$0xf]
    %v33 = vld [vmem:[%s3] sm:$0xf]
    %v34 = vld [vmem:[%s3 + $0x4] sm:$0xf]
    %v35 = vld [vmem:[%s3 + $0x8] sm:$0xf]
    %v36 = vld [vmem:[%s3 + $0xc] sm:$0xf]
    %v41 = vunpack.c.l.b16 %v33
    %v42 = vunpack.c.l.b16 %v34
    %v43 = vunpack.c.l.b16 %v35
    %v44 = vunpack.c.l.b16 %v36
    %v45 = vpack.c.b16 %v42, %v41
    %v46 = vpack.c.b16 %v44, %v43
    %vm49 = vcmask 261120
    %v51 = vsel %vm49, %v28, 0
    %53 = vmatpush.bf16.msra.mxu0 0
    %54 = vmatpush.bf16.msra.mxu0 0
    %55 = vmatpush.bf16.msra.mxu0 0
    %56 = vmatpush.bf16.msra.mxu0 0
    %57 = vmatpush.bf16.msra.mxu0 0
    %58 = vmatpush.bf16.msra.mxu0 0
    %59 = vmatpush.bf16.msra.mxu0 %v46
    %60 = vmatpush.bf16.msra.mxu0 %v45
    %61 = vmatmul.bf16.gmra.mxu0 %v51
    %v62 = vpop.f32.mrf.mxu0
    %v63 = vadd.f32 0.0, %v62
    %v64 = vpop.f32.mrf.mxu0
    %v65 = vadd.f32 0.0, %v64
    %66 = vdwg.mxu0
    %v69 = vunpack.c.l.b16 %v24
    %v70 = vunpack.c.l.b16 %v25
    %v71 = vpack.c.b16 %v70, %v69
    %v76 = vunpack.c.l.b16 %v29
    %v77 = vunpack.c.l.b16 %v30
    %v78 = vunpack.c.l.b16 %v31
    %v79 = vunpack.c.l.b16 %v32
    %v80 = vpack.c.b16 %v77, %v76
    %v81 = vpack.c.b16 %v79, %v78
    %v85 = vsel %vm49, %v71, 0
    %87 = vmatpush.bf16.msra.mxu0 0
    %88 = vmatpush.bf16.msra.mxu0 0
    %89 = vmatpush.bf16.msra.mxu0 0
    %90 = vmatpush.bf16.msra.mxu0 0
    %91 = vmatpush.bf16.msra.mxu0 0
    %92 = vmatpush.bf16.msra.mxu0 0
    %93 = vmatpush.bf16.msra.mxu0 %v81
    %94 = vmatpush.bf16.msra.mxu0 %v80
    %95 = vmatmul.bf16.gmra.mxu0 %v85
    %v96 = vpop.f32.mrf.mxu0
    %v97 = vadd.f32 %v63, %v96
    %v98 = vpop.f32.mrf.mxu0
    %v99 = vadd.f32 %v65, %v98
    %100 = vdwg.mxu0
    %v101 = vld [vmem:[%s4] sm:$0x1]
    %v103 = vperm.slane %v101, 0
    %v105 = vadd.f32 %v97, %v103
    %v106 = vadd.f32 %v99, %v103
    %vm107 = vcmask 64512
    %v108 = vsel %vm107, %v105, -inf
    %109 = vmax.xlane.f32.xlu0 %v108
    %v110 = vpop.xlane.xlu0 %109
    %v111 = vsel %vm107, %v106, -inf
    %112 = vmax.xlane.f32.xlu0 %v111
    %v113 = vpop.xlane.xlu0 %112
    %v114 = vsub.f32 %v105, %v110
    %v115 = vsub.f32 %v106, %v113
    %v116 = vmul.f32 %v114, 1.442695
    %v117 = vpow.pop %v116
    %v118 = vmul.f32 %v115, 1.442695
    %v119 = vpow.pop %v118
    %v120 = vsel %vm107, %v117, 0.0
    %121 = vadd.xlane.f32.xlu0 %v120
    %v122 = vpop.xlane.xlu0 %121
    %v123 = vsel %vm107, %v119, 0.0
    %124 = vadd.xlane.f32.xlu0 %v123
    %v125 = vpop.xlane.xlu0 %124
    %v126 = vrcp.pop %v122
    %v127 = vmul.f32 %v122, %v126
    %v128 = vsub.f32 1.0, %v127
    %v129 = vmul.f32 %v126, %v128
    %v130 = vadd.f32 %v126, %v129
    %vm131 = vweird.f32 %v122
    %vm132 = vweird.f32 %v126
    %vm133 = vmor %vm131, %vm132
    %v134 = vsel %vm133, %v126, %v130
    %v135 = vand.u32 2147483647, %v122
    %vm136 = vcmp.eq.f32.partialorder %v135, 8.507059e+37
    %v137 = vand.u32 %v122, 2147483648
    %v138 = vor.u32 1.1754944e-38, %v137
    %v139 = vsel %vm136, %v138, %v134
    %v140 = vmul.f32 %v117, %v139
    %v141 = vrcp.pop %v125
    %v142 = vmul.f32 %v125, %v141
    %v143 = vsub.f32 1.0, %v142
    %v144 = vmul.f32 %v141, %v143
    %v145 = vadd.f32 %v141, %v144
    %vm146 = vweird.f32 %v125
    %vm147 = vweird.f32 %v141
    %vm148 = vmor %vm146, %vm147
    %v149 = vsel %vm148, %v141, %v145
    %v150 = vand.u32 2147483647, %v125
    %vm151 = vcmp.eq.f32.partialorder %v150, 8.507059e+37
    %v152 = vand.u32 %v125, 2147483648
    %v153 = vor.u32 1.1754944e-38, %v152
    %v154 = vsel %vm151, %v153, %v149
    %v155 = vmul.f32 %v119, %v154
    %156 = vxpose.xlu0.b32.start [1/16] %v140, 128
    %157 = vxpose.xlu0.b32.cont [2/16] 0.0, 128
    %158 = vxpose.xlu0.b32.cont [3/16] 0.0, 128
    %159 = vxpose.xlu0.b32.cont [4/16] 0.0, 128
    %160 = vxpose.xlu0.b32.cont [5/16] 0.0, 128
    %161 = vxpose.xlu0.b32.cont [6/16] 0.0, 128
    %162 = vxpose.xlu0.b32.cont [7/16] 0.0, 128
    %163 = vxpose.xlu0.b32.cont [8/16] 0.0, 128
    %164 = vxpose.xlu0.b32.cont [9/16] 0.0, 128
    %165 = vxpose.xlu0.b32.cont [10/16] 0.0, 128
    %166 = vxpose.xlu0.b32.cont [11/16] 0.0, 128
    %167 = vxpose.xlu0.b32.cont [12/16] 0.0, 128
    %168 = vxpose.xlu0.b32.cont [13/16] 0.0, 128
    %169 = vxpose.xlu0.b32.cont [14/16] 0.0, 128
    %170 = vxpose.xlu0.b32.cont [15/16] 0.0, 128
    %171 = vxpose.xlu0.b32.end [16/16] 0.0, 128
    %v172 = vpop.trf.xlu0
    %v173 = vpop.trf.xlu0
    %v174 = vpop.trf.xlu0
    %v175 = vpop.trf.xlu0
    %v176 = vpop.trf.xlu0
    %v177 = vpop.trf.xlu0
    %v178 = vpop.trf.xlu0
    %v179 = vpop.trf.xlu0
    %v180 = vpop.trf.xlu0
    %v181 = vpop.trf.xlu0
    %v182 = vpop.trf.xlu0
    %v183 = vpop.trf.xlu0
    %v184 = vpop.trf.xlu0
    %v185 = vpop.trf.xlu0
    %v186 = vpop.trf.xlu0
    %v187 = vpop.trf.xlu0
    %188 = vxpose.xlu0.b32.start [1/16] %v155, 128
    %189 = vxpose.xlu0.b32.cont [2/16] 0.0, 128
    %190 = vxpose.xlu0.b32.cont [3/16] 0.0, 128
    %191 = vxpose.xlu0.b32.cont [4/16] 0.0, 128
    %192 = vxpose.xlu0.b32.cont [5/16] 0.0, 128
    %193 = vxpose.xlu0.b32.cont [6/16] 0.0, 128
    %194 = vxpose.xlu0.b32.cont [7/16] 0.0, 128
    %195 = vxpose.xlu0.b32.cont [8/16] 0.0, 128
    %196 = vxpose.xlu0.b32.cont [9/16] 0.0, 128
    %197 = vxpose.xlu0.b32.cont [10/16] 0.0, 128
    %198 = vxpose.xlu0.b32.cont [11/16] 0.0, 128
    %199 = vxpose.xlu0.b32.cont [12/16] 0.0, 128
    %200 = vxpose.xlu0.b32.cont [13/16] 0.0, 128
    %201 = vxpose.xlu0.b32.cont [14/16] 0.0, 128
    %202 = vxpose.xlu0.b32.cont [15/16] 0.0, 128
    %203 = vxpose.xlu0.b32.end [16/16] 0.0, 128
    %v204 = vpop.trf.xlu0
    %v205 = vpop.trf.xlu0
    %v206 = vpop.trf.xlu0
    %v207 = vpop.trf.xlu0
    %v208 = vpop.trf.xlu0
    %v209 = vpop.trf.xlu0
    %v210 = vpop.trf.xlu0
    %v211 = vpop.trf.xlu0
    %v212 = vpop.trf.xlu0
    %v213 = vpop.trf.xlu0
    %v214 = vpop.trf.xlu0
    %v215 = vpop.trf.xlu0
    %v216 = vpop.trf.xlu0
    %v217 = vpop.trf.xlu0
    %v218 = vpop.trf.xlu0
    %v219 = vpop.trf.xlu0
    %v220 = vpack.c.bf16 %v172, %v172
    %v221 = vpack.c.bf16 %v204, %v204
    %v223 = vsel %vm107, %v220, 0
    %vm225 = vcmask 1043456
    %v227 = vsel %vm225, %v24, 0
    %229 = vmatpush.bf16.msra.mxu0 0
    %230 = vmatpush.bf16.msra.mxu0 0
    %231 = vmatpush.bf16.msra.mxu0 0
    %232 = vmatpush.bf16.msra.mxu0 0
    %233 = vmatpush.bf16.msra.mxu0 0
    %234 = vmatpush.bf16.msra.mxu0 0
    %235 = vmatpush.bf16.msra.mxu0 0
    %236 = vmatpush.bf16.msra.mxu0 %v227
    %237 = vmatmul.bf16.gmra.mxu0 %v223
    %v238 = vpop.f32.mrf.mxu0
    %v239 = vadd.f32 0.0, %v238
    %v240 = vpop.f32.mrf.mxu0
    %241 = vdwg.mxu0
    %v243 = vsel %vm107, %v221, 0
    %v246 = vsel %vm225, %v25, 0
    %248 = vmatpush.bf16.msra.mxu0 0
    %249 = vmatpush.bf16.msra.mxu0 0
    %250 = vmatpush.bf16.msra.mxu0 0
    %251 = vmatpush.bf16.msra.mxu0 0
    %252 = vmatpush.bf16.msra.mxu0 0
    %253 = vmatpush.bf16.msra.mxu0 0
    %254 = vmatpush.bf16.msra.mxu0 0
    %255 = vmatpush.bf16.msra.mxu0 %v246
    %256 = vmatmul.bf16.gmra.mxu0 %v243
    %v257 = vpop.f32.mrf.mxu0
    %v258 = vadd.f32 0.0, %v257
    %v259 = vpop.f32.mrf.mxu0
    %260 = vdwg.mxu0
    %261 = vst.msk [vmem:[#allocation2] sm:$0xff] %vm49, %v239
    %262 = vst.msk [vmem:[#allocation2 + $0x8] sm:$0xff] %vm49, %v258
    // Predicated region
    $region22: #{tpu_custom_call.1} parent=1 // pred_check
      _
    $region23: #{tpu_custom_call.1} parent=1 // pred_check_branch
      %264 = sbr.rel (0) target = $region25
    $region24: #{tpu_custom_call.1} parent=1 // pred_region
      %266 = vsyncadd [#allocation3], 0
      %s267 = sshll.u32 [#allocation2], 4
      %s268 = int_to_ptr.vmem [resolvable:$true] %s267
      %s269 = sshll.u32 %s5, 4
      %s270 = int_to_ptr.hbm [resolvable:$true] %s269
      %275 = dma.vmem_to_hbm [thread:$0]  %s268, 256, %s270, [#allocation3], 128, 128, 8
    $region25: #{tpu_custom_call.1} parent=1 // pred_fallthru
      _
    // Predicated region
    $region26: #{tpu_custom_call.1} parent=1 // pred_check
      _
    $region27: #{tpu_custom_call.1} parent=1 // pred_check_branch
      %277 = sbr.rel (0) target = $region29
    $region28: #{tpu_custom_call.1} parent=1 // pred_region
      %279 = dma.done [#allocation3], 256
    $region29: #{tpu_custom_call.1} parent=1 // pred_fallthru
      _
    %280 = vsyncpa [#allocation3], 1

</llo_original>
